<compile_context>
chip_gen: v6e
topology: v6e:2x2x1
jax: 0.10.0
libtpu: 0.0.40
codegen_flags: <defaults>
</compile_context>

<pallas_src>
import jax
import jax.numpy as jnp
from jax.experimental import pallas as pl
from jax.experimental.pallas import tpu as pltpu

NUM_CLASSES = 5
IN_FEATURES = 21 * 3  # 63
H1, H2, H3 = 40, 20, 10


def _mlp_kernel(x_ref, w1_ref, b1_ref, w2_ref, b2_ref, w3_ref, b3_ref,
                w4_ref, b4_ref, o_ref):
    # fc1 (bf16 x bf16 -> f32 accumulate on the MXU) + bias + ReLU.
    # dropout1 is identity at inference.
    h = jnp.dot(x_ref[...], w1_ref[...],
                preferred_element_type=jnp.float32) + b1_ref[...]
    h = jnp.maximum(h, 0.0)

    # fc2 + ReLU   (dropout2 identity)
    h = jnp.dot(h, w2_ref[...], preferred_element_type=jnp.float32) + b2_ref[...]
    h = jnp.maximum(h, 0.0)

    # fc3 + ReLU   (dropout3 identity)
    h = jnp.dot(h, w3_ref[...], preferred_element_type=jnp.float32) + b3_ref[...]
    h = jnp.maximum(h, 0.0)

    # fc4
    logits = jnp.dot(h, w4_ref[...], preferred_element_type=jnp.float32) + b4_ref[...]

    # softmax over dim=1 (class axis), numerically stabilized.
    m = jnp.max(logits, axis=-1, keepdims=True)
    e = jnp.exp(logits - m)
    denom = jnp.sum(e, axis=-1, keepdims=True)
    o_ref[...] = e * pl.reciprocal(denom, approx=True)


def _round_up(n, m):
    return ((n + m - 1) // m) * m


def simple_nn2_forward(x, params, *, tile_b=512):
    """x: (B, 63) float32; params: dict of weights (in,out) and biases (1,out)."""
    w1, b1, w2, b2, w3, b3, w4, b4 = (
        params["w1"], params["b1"], params["w2"], params["b2"],
        params["w3"], params["b3"], params["w4"], params["b4"],
    )
    B = x.shape[0]

    # Batch tile: multiple of 8 sublanes, capped at tile_b (amortizes the
    # ~0.35us per-grid-step overhead while keeping VMEM footprint ~1-2 MB,
    # which fits v7x's smaller VMEM without special-casing).
    tb = min(tile_b, _round_up(B, 8))
    b_pad = _round_up(B, tb)
    if b_pad != B:
        x = jnp.pad(x, ((0, b_pad - B), (0, 0)))

    # bf16 streaming of the dominant HBM input; accumulation stays f32.
    x_bf = x.astype(jnp.bfloat16)
    w1_bf = w1.astype(jnp.bfloat16)

    n_tiles = b_pad // tb

    # Weights/biases: full-array blocks, constant index_map -> VMEM-resident.
    resident = lambda a: pl.BlockSpec(a.shape, lambda i: (0,) * a.ndim)

    cost = pl.CostEstimate(
        flops=2 * b_pad * (IN_FEATURES * H1 + H1 * H2 + H2 * H3
                           + H3 * NUM_CLASSES),
        transcendentals=b_pad * (NUM_CLASSES + 1),
        bytes_accessed=(b_pad * IN_FEATURES * 2            # bf16 x stream
                        + b_pad * NUM_CLASSES * 4          # f32 output
                        + sum(int(p.size) * 4 for p in params.values())),
    )

    out = pl.pallas_call(
        _mlp_kernel,
        out_shape=jax.ShapeDtypeStruct((b_pad, NUM_CLASSES), jnp.float32),
        grid=(n_tiles,),
        in_specs=[
            pl.BlockSpec((tb, IN_FEATURES), lambda i: (i, 0)),
            resident(w1_bf), resident(b1),
            resident(w2), resident(b2),
            resident(w3), resident(b3),
            resident(w4), resident(b4),
        ],
        out_specs=pl.BlockSpec((tb, NUM_CLASSES), lambda i: (i, 0)),
        compiler_params=pltpu.CompilerParams(
            dimension_semantics=("parallel",)),
        cost_estimate=cost,
    )(x_bf, w1_bf, b1, w2, b2, w3, b3, w4, b4)

    return out[:B]


def init_params(key, num_classes=NUM_CLASSES):
    """Deterministic init mimicking nn.Linear (uniform +-1/sqrt(fan_in)).
    Weights stored transposed as (in, out) so the kernel does x @ W + b."""
    dims = [(IN_FEATURES, H1), (H1, H2), (H2, H3), (H3, num_classes)]
    params = {}
    for i, (fan_in, fan_out) in enumerate(dims, start=1):
        key, kw, kb = jax.random.split(key, 3)
        bound = 1.0 / jnp.sqrt(float(fan_in))
        params[f"w{i}"] = jax.random.uniform(
            kw, (fan_in, fan_out), jnp.float32, -bound, bound)
        params[f"b{i}"] = jax.random.uniform(
            kb, (1, fan_out), jnp.float32, -bound, bound)
    return params


def _reference_forward(x, params):
    """Pure-JAX f32 reference of the PyTorch forward (eval mode)."""
    h = jnp.maximum(x @ params["w1"] + params["b1"], 0.0)
    h = jnp.maximum(h @ params["w2"] + params["b2"], 0.0)
    h = jnp.maximum(h @ params["w3"] + params["b3"], 0.0)
    logits = h @ params["w4"] + params["b4"]
    return jax.nn.softmax(logits, axis=-1)


if __name__ == "__main__":
    key = jax.random.PRNGKey(0)
    key, kx = jax.random.split(key)
    batch = 8
    x = jax.random.normal(kx, (batch, IN_FEATURES), dtype=jnp.float32)
    params = init_params(key)

    out = simple_nn2_forward(x, params)
    out = jax.block_until_ready(out)

    assert out.shape == (batch, NUM_CLASSES)
    # approx=True reciprocal + bf16 input: relax tolerances accordingly.
    assert jnp.allclose(jnp.sum(out, axis=-1), 1.0, atol=2e-3)
    ref = _reference_forward(x, params)
    assert jnp.allclose(out, ref, atol=5e-2)
    print("KERNEL_OK")
</pallas_src>

<mosaic_0001>
module attributes {stable_mosaic.version = 11 : i64} {
  func.func @_mlp_kernel(%arg0: i32, %arg1: memref<8x63xbf16, #tpu.memory_space<vmem>>, %arg2: memref<63x40xbf16, #tpu.memory_space<vmem>>, %arg3: memref<1x40xf32, #tpu.memory_space<vmem>>, %arg4: memref<40x20xf32, #tpu.memory_space<vmem>>, %arg5: memref<1x20xf32, #tpu.memory_space<vmem>>, %arg6: memref<20x10xf32, #tpu.memory_space<vmem>>, %arg7: memref<1x10xf32, #tpu.memory_space<vmem>>, %arg8: memref<10x5xf32, #tpu.memory_space<vmem>>, %arg9: memref<1x5xf32, #tpu.memory_space<vmem>>, %arg10: memref<8x5xf32, #tpu.memory_space<vmem>>) attributes {dimension_semantics = [#tpu.dimension_semantics<parallel>], iteration_bounds = array<i64: 1>, scalar_prefetch = 0 : i64, scratch_operands = 0 : i64, tpu.core_type = #tpu.core_type<tc>, window_params = [{transform_indices = @transform_0, window_bounds = array<i64: 8, 63>}, {pipeline_mode = #tpu.pipeline_mode<synchronous>, transform_indices = @transform_1, window_bounds = array<i64: 63, 40>}, {pipeline_mode = #tpu.pipeline_mode<synchronous>, transform_indices = @transform_2, window_bounds = array<i64: 1, 40>}, {pipeline_mode = #tpu.pipeline_mode<synchronous>, transform_indices = @transform_3, window_bounds = array<i64: 40, 20>}, {pipeline_mode = #tpu.pipeline_mode<synchronous>, transform_indices = @transform_4, window_bounds = array<i64: 1, 20>}, {pipeline_mode = #tpu.pipeline_mode<synchronous>, transform_indices = @transform_5, window_bounds = array<i64: 20, 10>}, {pipeline_mode = #tpu.pipeline_mode<synchronous>, transform_indices = @transform_6, window_bounds = array<i64: 1, 10>}, {pipeline_mode = #tpu.pipeline_mode<synchronous>, transform_indices = @transform_7, window_bounds = array<i64: 10, 5>}, {pipeline_mode = #tpu.pipeline_mode<synchronous>, transform_indices = @transform_8, window_bounds = array<i64: 1, 5>}, {transform_indices = @transform_9, window_bounds = array<i64: 8, 5>}]} {
    %c0 = arith.constant 0 : index
    %c0_0 = arith.constant 0 : index
    %0 = vector.load %arg1[%c0, %c0_0] : memref<8x63xbf16, #tpu.memory_space<vmem>>, vector<8x63xbf16>
    %c0_1 = arith.constant 0 : index
    %c0_2 = arith.constant 0 : index
    %1 = vector.load %arg2[%c0_1, %c0_2] : memref<63x40xbf16, #tpu.memory_space<vmem>>, vector<63x40xbf16>
    %cst = arith.constant dense<0.000000e+00> : vector<8x40xf32>
    %2 = tpu.matmul %0, %1, %cst {dimension_numbers = #tpu.dot_dimension_numbers<[1], [0], [0], [1], [0, 0, 1, 1], [], []>} : vector<8x63xbf16>, vector<63x40xbf16>, vector<8x40xf32> -> vector<8x40xf32>
    %c0_3 = arith.constant 0 : index
    %c0_4 = arith.constant 0 : index
    %3 = vector.load %arg3[%c0_3, %c0_4] : memref<1x40xf32, #tpu.memory_space<vmem>>, vector<1x40xf32>
    %4 = vector.broadcast %3 : vector<1x40xf32> to vector<8x40xf32>
    %5 = arith.addf %2, %4 : vector<8x40xf32>
    %cst_5 = arith.constant 0.000000e+00 : f32
    %6 = vector.broadcast %cst_5 : f32 to vector<8x40xf32>
    %7 = arith.maximumf %5, %6 : vector<8x40xf32>
    %c0_6 = arith.constant 0 : index
    %c0_7 = arith.constant 0 : index
    %8 = vector.load %arg4[%c0_6, %c0_7] : memref<40x20xf32, #tpu.memory_space<vmem>>, vector<40x20xf32>
    %cst_8 = arith.constant dense<0.000000e+00> : vector<8x20xf32>
    %9 = tpu.matmul %7, %8, %cst_8 {dimension_numbers = #tpu.dot_dimension_numbers<[1], [0], [0], [1], [0, 0, 1, 1], [], []>} : vector<8x40xf32>, vector<40x20xf32>, vector<8x20xf32> -> vector<8x20xf32>
    %c0_9 = arith.constant 0 : index
    %c0_10 = arith.constant 0 : index
    %10 = vector.load %arg5[%c0_9, %c0_10] : memref<1x20xf32, #tpu.memory_space<vmem>>, vector<1x20xf32>
    %11 = vector.broadcast %10 : vector<1x20xf32> to vector<8x20xf32>
    %12 = arith.addf %9, %11 : vector<8x20xf32>
    %cst_11 = arith.constant 0.000000e+00 : f32
    %13 = vector.broadcast %cst_11 : f32 to vector<8x20xf32>
    %14 = arith.maximumf %12, %13 : vector<8x20xf32>
    %c0_12 = arith.constant 0 : index
    %c0_13 = arith.constant 0 : index
    %15 = vector.load %arg6[%c0_12, %c0_13] : memref<20x10xf32, #tpu.memory_space<vmem>>, vector<20x10xf32>
    %cst_14 = arith.constant dense<0.000000e+00> : vector<8x10xf32>
    %16 = tpu.matmul %14, %15, %cst_14 {dimension_numbers = #tpu.dot_dimension_numbers<[1], [0], [0], [1], [0, 0, 1, 1], [], []>} : vector<8x20xf32>, vector<20x10xf32>, vector<8x10xf32> -> vector<8x10xf32>
    %c0_15 = arith.constant 0 : index
    %c0_16 = arith.constant 0 : index
    %17 = vector.load %arg7[%c0_15, %c0_16] : memref<1x10xf32, #tpu.memory_space<vmem>>, vector<1x10xf32>
    %18 = vector.broadcast %17 : vector<1x10xf32> to vector<8x10xf32>
    %19 = arith.addf %16, %18 : vector<8x10xf32>
    %cst_17 = arith.constant 0.000000e+00 : f32
    %20 = vector.broadcast %cst_17 : f32 to vector<8x10xf32>
    %21 = arith.maximumf %19, %20 : vector<8x10xf32>
    %c0_18 = arith.constant 0 : index
    %c0_19 = arith.constant 0 : index
    %22 = vector.load %arg8[%c0_18, %c0_19] : memref<10x5xf32, #tpu.memory_space<vmem>>, vector<10x5xf32>
    %cst_20 = arith.constant dense<0.000000e+00> : vector<8x5xf32>
    %23 = tpu.matmul %21, %22, %cst_20 {dimension_numbers = #tpu.dot_dimension_numbers<[1], [0], [0], [1], [0, 0, 1, 1], [], []>} : vector<8x10xf32>, vector<10x5xf32>, vector<8x5xf32> -> vector<8x5xf32>
    %c0_21 = arith.constant 0 : index
    %c0_22 = arith.constant 0 : index
    %24 = vector.load %arg9[%c0_21, %c0_22] : memref<1x5xf32, #tpu.memory_space<vmem>>, vector<1x5xf32>
    %25 = vector.broadcast %24 : vector<1x5xf32> to vector<8x5xf32>
    %26 = arith.addf %23, %25 : vector<8x5xf32>
    %cst_23 = arith.constant dense<0xFF800000> : vector<8xf32>
    %27 = vector.multi_reduction <maximumf>, %26, %cst_23 [1] : vector<8x5xf32> to vector<8xf32>
    %28 = vector.shape_cast %27 : vector<8xf32> to vector<8x1xf32>
    %29 = vector.broadcast %28 : vector<8x1xf32> to vector<8x5xf32>
    %30 = arith.subf %26, %29 : vector<8x5xf32>
    %31 = math.exp %30 : vector<8x5xf32>
    %cst_24 = arith.constant dense<0.000000e+00> : vector<8xf32>
    %32 = vector.multi_reduction <add>, %31, %cst_24 [1] : vector<8x5xf32> to vector<8xf32>
    %33 = vector.shape_cast %32 : vector<8xf32> to vector<8x1xf32>
    %34 = tpu.reciprocal %33 {approx = true} : vector<8x1xf32> -> vector<8x1xf32>
    %35 = vector.broadcast %34 : vector<8x1xf32> to vector<8x5xf32>
    %36 = arith.mulf %31, %35 : vector<8x5xf32>
    %c0_25 = arith.constant 0 : index
    %c0_26 = arith.constant 0 : index
    %37 = vector.load %arg10[%c0_25, %c0_26] : memref<8x5xf32, #tpu.memory_space<vmem>>, vector<8x5xf32>
    tpu.vector_store %arg10[%c0_25, %c0_26], %36 {strides = array<i32>} : memref<8x5xf32, #tpu.memory_space<vmem>>, vector<8x5xf32>,
    return
  }
  func.func @transform_0(%arg0: i32) -> (i32, i32) {
    %c0_i32 = arith.constant 0 : i32
    %c0_i32_0 = arith.constant 0 : i32
    return %arg0, %c0_i32 : i32, i32
  }
  func.func @transform_1(%arg0: i32) -> (i32, i32) {
    %c0_i32 = arith.constant 0 : i32
    %c0_i32_0 = arith.constant 0 : i32
    %c0_i32_1 = arith.constant 0 : i32
    return %c0_i32, %c0_i32_0 : i32, i32
  }
  func.func @transform_2(%arg0: i32) -> (i32, i32) {
    %c0_i32 = arith.constant 0 : i32
    %c0_i32_0 = arith.constant 0 : i32
    %c0_i32_1 = arith.constant 0 : i32
    return %c0_i32, %c0_i32_0 : i32, i32
  }
  func.func @transform_3(%arg0: i32) -> (i32, i32) {
    %c0_i32 = arith.constant 0 : i32
    %c0_i32_0 = arith.constant 0 : i32
    %c0_i32_1 = arith.constant 0 : i32
    return %c0_i32, %c0_i32_0 : i32, i32
  }
  func.func @transform_4(%arg0: i32) -> (i32, i32) {
    %c0_i32 = arith.constant 0 : i32
    %c0_i32_0 = arith.constant 0 : i32
    %c0_i32_1 = arith.constant 0 : i32
    return %c0_i32, %c0_i32_0 : i32, i32
  }
  func.func @transform_5(%arg0: i32) -> (i32, i32) {
    %c0_i32 = arith.constant 0 : i32
    %c0_i32_0 = arith.constant 0 : i32
    %c0_i32_1 = arith.constant 0 : i32
    return %c0_i32, %c0_i32_0 : i32, i32
  }
  func.func @transform_6(%arg0: i32) -> (i32, i32) {
    %c0_i32 = arith.constant 0 : i32
    %c0_i32_0 = arith.constant 0 : i32
    %c0_i32_1 = arith.constant 0 : i32
    return %c0_i32, %c0_i32_0 : i32, i32
  }
  func.func @transform_7(%arg0: i32) -> (i32, i32) {
    %c0_i32 = arith.constant 0 : i32
    %c0_i32_0 = arith.constant 0 : i32
    %c0_i32_1 = arith.constant 0 : i32
    return %c0_i32, %c0_i32_0 : i32, i32
  }
  func.func @transform_8(%arg0: i32) -> (i32, i32) {
    %c0_i32 = arith.constant 0 : i32
    %c0_i32_0 = arith.constant 0 : i32
    %c0_i32_1 = arith.constant 0 : i32
    return %c0_i32, %c0_i32_0 : i32, i32
  }
  func.func @transform_9(%arg0: i32) -> (i32, i32) {
    %c0_i32 = arith.constant 0 : i32
    %c0_i32_0 = arith.constant 0 : i32
    return %arg0, %c0_i32 : i32, i32
  }
}

</mosaic_0001>

<llo_original>
// kernel: tpu_custom_call.1
$region0: #{tpu_custom_call.1}
  #allocation0 [shape = 'u32[]', space=smem, size = 0x4, offset = 0x4, fixed_abs, tag = 'smem constant byte address 0x4 - core index']
  #allocation1 [shape = 'u32[144,128]{1,0:T(1,128)}', space=vmem, size = 0x12000, scoped, tag = 'internal scratch']
  %s0 = inlined_call_operand.vmem [shape: bf16[8,63], index: 0, kind: input, shape index: {}]
  %s1 = inlined_call_operand.vmem [shape: bf16[63,40], index: 1, kind: input, shape index: {}]
  %s2 = inlined_call_operand.vmem [shape: f32[1,40], index: 2, kind: input, shape index: {}]
  %s3 = inlined_call_operand.vmem [shape: f32[40,20], index: 3, kind: input, shape index: {}]
  %s4 = inlined_call_operand.vmem [shape: f32[1,20], index: 4, kind: input, shape index: {}]
  %s5 = inlined_call_operand.vmem [shape: f32[20,10], index: 5, kind: input, shape index: {}]
  %s6 = inlined_call_operand.vmem [shape: f32[1,10], index: 6, kind: input, shape index: {}]
  %s7 = inlined_call_operand.vmem [shape: f32[10,5], index: 7, kind: input, shape index: {}]
  %s8 = inlined_call_operand.vmem [shape: f32[1,5], index: 8, kind: input, shape index: {}]
  %s9 = inlined_call_operand.hbm [shape: f32[8,5], index: 9, kind: output, shape index: {}]
  %s10 = sld [smem:[#allocation0]]
  $region46: #{tpu_custom_call.1} parent=0
    _
  %s12 = ssub.s32 1, %s10
  %s13 = scalar_select 0, %s12, %s10
  $region1: #{tpu_custom_call.1} parent=0
    #allocation2 [shape = 'u8[4096]{0}', space=vmem, size = 0x1000, scoped, tag = 'output window, operand 0, single buffered']
    #allocation3 [shape = 's32[1]{0}', space=sflag, size = 0x4, scoped, tag = 'scoped memory for tpu_custom_call.1']
    %14 = vsyncpa [#allocation3], 0
    // Predicated region
    $region2: #{tpu_custom_call.1} parent=1 // pred_check
      _
    $region3: #{tpu_custom_call.1} parent=1 // pred_check_branch
      %16 = sbr.rel (0) target = $region5
    $region4: #{tpu_custom_call.1} parent=1 // pred_region
      _
    $region5: #{tpu_custom_call.1} parent=1 // pred_fallthru
      _
    // Predicated region
    $region6: #{tpu_custom_call.1} parent=1 // pred_check
      _
    $region7: #{tpu_custom_call.1} parent=1 // pred_check_branch
      %18 = sbr.rel (0) target = $region9
    $region8: #{tpu_custom_call.1} parent=1 // pred_region
      _
    $region9: #{tpu_custom_call.1} parent=1 // pred_fallthru
      _
    // Predicated region
    $region10: #{tpu_custom_call.1} parent=1 // pred_check
      _
    $region11: #{tpu_custom_call.1} parent=1 // pred_check_branch
      %20 = sbr.rel (0) target = $region13
    $region12: #{tpu_custom_call.1} parent=1 // pred_region
      _
    $region13: #{tpu_custom_call.1} parent=1 // pred_fallthru
      _
    // Predicated region
    $region14: #{tpu_custom_call.1} parent=1 // pred_check
      _
    $region15: #{tpu_custom_call.1} parent=1 // pred_check_branch
      %22 = sbr.rel (0) target = $region17
    $region16: #{tpu_custom_call.1} parent=1 // pred_region
      _
    $region17: #{tpu_custom_call.1} parent=1 // pred_fallthru
      _
    // Predicated region
    $region18: #{tpu_custom_call.1} parent=1 // pred_check
      _
    $region19: #{tpu_custom_call.1} parent=1 // pred_check_branch
      %24 = sbr.rel (0) target = $region21
    $region20: #{tpu_custom_call.1} parent=1 // pred_region
      _
    $region21: #{tpu_custom_call.1} parent=1 // pred_fallthru
      _
    // Predicated region
    $region22: #{tpu_custom_call.1} parent=1 // pred_check
      _
    $region23: #{tpu_custom_call.1} parent=1 // pred_check_branch
      %26 = sbr.rel (0) target = $region25
    $region24: #{tpu_custom_call.1} parent=1 // pred_region
      _
    $region25: #{tpu_custom_call.1} parent=1 // pred_fallthru
      _
    // Predicated region
    $region26: #{tpu_custom_call.1} parent=1 // pred_check
      _
    $region27: #{tpu_custom_call.1} parent=1 // pred_check_branch
      %28 = sbr.rel (0) target = $region29
    $region28: #{tpu_custom_call.1} parent=1 // pred_region
      _
    $region29: #{tpu_custom_call.1} parent=1 // pred_fallthru
      _
    // Predicated region
    $region30: #{tpu_custom_call.1} parent=1 // pred_check
      _
    $region31: #{tpu_custom_call.1} parent=1 // pred_check_branch
      %30 = sbr.rel (0) target = $region33
    $region32: #{tpu_custom_call.1} parent=1 // pred_region
      _
    $region33: #{tpu_custom_call.1} parent=1 // pred_fallthru
      _
    // Predicated region
    $region34: #{tpu_custom_call.1} parent=1 // pred_check
      _
    $region35: #{tpu_custom_call.1} parent=1 // pred_check_branch
      %32 = sbr.rel (0) target = $region37
    $region36: #{tpu_custom_call.1} parent=1 // pred_region
      _
    $region37: #{tpu_custom_call.1} parent=1 // pred_fallthru
      _
    %v34 = vld [vmem:[%s0] sm:$0xf]
    %v35 = vld [vmem:[%s1] sm:$0xf]
    %v36 = vld [vmem:[%s1 + $0x4] sm:$0xf]
    %v37 = vld [vmem:[%s1 + $0x8] sm:$0xf]
    %v38 = vld [vmem:[%s1 + $0xc] sm:$0xf]
    %v39 = vld [vmem:[%s1 + $0x10] sm:$0xf]
    %v40 = vld [vmem:[%s1 + $0x14] sm:$0xf]
    %v41 = vld [vmem:[%s1 + $0x18] sm:$0xf]
    %v42 = vld [vmem:[%s1 + $0x1c] sm:$0xf]
    %v43 = vld [vmem:[%s2] sm:$0x1]
    %v45 = vlaneseq
    %v46 = vshrl.u32 %v45, 7
    %v47 = vsub.s32 0, %v46
    %v48 = vrot.slane %v43, %v47
    %v58 = vunpack.c.l.b16 %v35
    %v59 = vunpack.c.l.b16 %v36
    %v60 = vunpack.c.l.b16 %v37
    %v61 = vunpack.c.l.b16 %v38
    %v62 = vunpack.c.l.b16 %v39
    %v63 = vunpack.c.l.b16 %v40
    %v64 = vunpack.c.l.b16 %v41
    %v65 = vunpack.c.l.b16 %v42
    %v66 = vpack.c.b16 %v59, %v58
    %v67 = vpack.c.b16 %v61, %v60
    %v68 = vpack.c.b16 %v63, %v62
    %v69 = vpack.c.b16 %v65, %v64
    %vm73 = vcmask 515072
    %v75 = vsel %vm73, %v34, 0
    %vm77 = vcmask 1046528
    %vm78 = vcmask 1047552
    %v79 = vsel %vm77, 4294967295, 65535
    %v80 = vsel %vm78, %v79, 0
    %v82 = vand.u32 %v69, %v80
    %84 = vmatprep.subr.bf16.mxu0 0
    %85 = vmatpush1.bf16.msra.mxu0 0
    %86 = vmatprep.subr.bf16.mxu0 0
    %87 = vmatpush1.bf16.msra.mxu0 0
    %88 = vmatprep.subr.bf16.mxu0 0
    %89 = vmatpush1.bf16.msra.mxu0 0
    %90 = vmatprep.subr.bf16.mxu0 0
    %91 = vmatpush1.bf16.msra.mxu0 0
    %92 = vmatprep.subr.bf16.mxu0 0
    %93 = vmatpush1.bf16.msra.mxu0 %v82
    %94 = vmatprep.subr.bf16.mxu0 0
    %95 = vmatpush1.bf16.msra.mxu0 %v68
    %96 = vmatprep.subr.bf16.mxu0 0
    %97 = vmatpush1.bf16.msra.mxu0 %v67
    %98 = vmatprep.subr.bf16.mxu0 0
    %99 = vmatpush1.bf16.msra.mxu0 %v66
    %100 = vmatprep.subr.bf16.mxu0 0
    %101 = vmatpush2.bf16.msra.mxu0 0
    %102 = vmatprep.subr.bf16.mxu0 0
    %103 = vmatpush2.bf16.msra.mxu0 0
    %104 = vmatprep.subr.bf16.mxu0 0
    %105 = vmatpush2.bf16.msra.mxu0 0
    %106 = vmatprep.subr.bf16.mxu0 0
    %107 = vmatpush2.bf16.msra.mxu0 0
    %108 = vmatprep.subr.bf16.mxu0 0
    %109 = vmatpush2.bf16.msra.mxu0 0
    %110 = vmatprep.subr.bf16.mxu0 0
    %111 = vmatpush2.bf16.msra.mxu0 0
    %112 = vmatprep.subr.bf16.mxu0 0
    %113 = vmatpush2.bf16.msra.mxu0 0
    %114 = vmatprep.subr.bf16.mxu0 0
    %115 = vmatpush2.bf16.msra.mxu0 0
    %116 = vmatprep.mubr.bf16.mxu0 0
    %117 = vmatmul.mubr.bf16.gmra.mxu0 %v75
    %v118 = vpop.f32.mrf.mxu0
    %v119 = vadd.f32 %v48, %v118
    %v120 = vpop.f32.mrf.mxu0
    %v121 = vpop.f32.mrf.mxu0
    %v122 = vpop.f32.mrf.mxu0
    %123 = vdwg.mxu0
    %v124 = vmax.f32 %v119, 0.0
    %v125 = vld [vmem:[%s3] sm:$0xff]
    %v126 = vld [vmem:[%s3 + $0x8] sm:$0xff]
    %v127 = vld [vmem:[%s3 + $0x10] sm:$0xff]
    %v128 = vld [vmem:[%s3 + $0x18] sm:$0xff]
    %v129 = vld [vmem:[%s3 + $0x20] sm:$0xff]
    %v130 = vld [vmem:[%s4] sm:$0x1]
    %v132 = vlaneseq
    %v133 = vshrl.u32 %v132, 7
    %v134 = vsub.s32 0, %v133
    %v135 = vrot.slane %v130, %v134
    %vm137 = vcmask 326656
    %v139 = vsel %vm137, %v124, 0
    %141 = vmatprep.subr.mxu0 0.0
    %142 = vmatpush1.msra.mxu0 0.0
    %143 = vmatprep.subr.mxu0 0.0
    %144 = vmatpush1.msra.mxu0 0.0
    %145 = vmatprep.subr.mxu0 0.0
    %146 = vmatpush1.msra.mxu0 0.0
    %147 = vmatprep.subr.mxu0 0.0
    %148 = vmatpush1.msra.mxu0 0.0
    %149 = vmatprep.subr.mxu0 0.0
    %150 = vmatpush1.msra.mxu0 0.0
    %151 = vmatprep.subr.mxu0 0.0
    %152 = vmatpush1.msra.mxu0 0.0
    %153 = vmatprep.subr.mxu0 0.0
    %154 = vmatpush1.msra.mxu0 0.0
    %155 = vmatprep.subr.mxu0 0.0
    %156 = vmatpush1.msra.mxu0 0.0
    %157 = vmatprep.subr.mxu0 0.0
    %158 = vmatpush1.msra.mxu0 0.0
    %159 = vmatprep.subr.mxu0 0.0
    %160 = vmatpush1.msra.mxu0 0.0
    %161 = vmatprep.subr.mxu0 0.0
    %162 = vmatpush1.msra.mxu0 0.0
    %163 = vmatprep.subr.mxu0 0.0
    %164 = vmatpush1.msra.mxu0 %v129
    %165 = vmatprep.subr.mxu0 0.0
    %166 = vmatpush1.msra.mxu0 %v128
    %167 = vmatprep.subr.mxu0 0.0
    %168 = vmatpush1.msra.mxu0 %v127
    %169 = vmatprep.subr.mxu0 0.0
    %170 = vmatpush1.msra.mxu0 %v126
    %171 = vmatprep.subr.mxu0 0.0
    %172 = vmatpush1.msra.mxu0 %v125
    %173 = vmatprep.subr.mxu0 0.0
    %174 = vmatpush2.msra.mxu0 0.0
    %175 = vmatprep.subr.mxu0 0.0
    %176 = vmatpush2.msra.mxu0 0.0
    %177 = vmatprep.subr.mxu0 0.0
    %178 = vmatpush2.msra.mxu0 0.0
    %179 = vmatprep.subr.mxu0 0.0
    %180 = vmatpush2.msra.mxu0 0.0
    %181 = vmatprep.subr.mxu0 0.0
    %182 = vmatpush2.msra.mxu0 0.0
    %183 = vmatprep.subr.mxu0 0.0
    %184 = vmatpush2.msra.mxu0 0.0
    %185 = vmatprep.subr.mxu0 0.0
    %186 = vmatpush2.msra.mxu0 0.0
    %187 = vmatprep.subr.mxu0 0.0
    %188 = vmatpush2.msra.mxu0 0.0
    %189 = vmatprep.subr.mxu0 0.0
    %190 = vmatpush2.msra.mxu0 0.0
    %191 = vmatprep.subr.mxu0 0.0
    %192 = vmatpush2.msra.mxu0 0.0
    %193 = vmatprep.subr.mxu0 0.0
    %194 = vmatpush2.msra.mxu0 0.0
    %195 = vmatprep.subr.mxu0 0.0
    %196 = vmatpush2.msra.mxu0 0.0
    %197 = vmatprep.subr.mxu0 0.0
    %198 = vmatpush2.msra.mxu0 0.0
    %199 = vmatprep.subr.mxu0 0.0
    %200 = vmatpush2.msra.mxu0 0.0
    %201 = vmatprep.subr.mxu0 0.0
    %202 = vmatpush2.msra.mxu0 0.0
    %203 = vmatprep.subr.mxu0 0.0
    %204 = vmatpush2.msra.mxu0 0.0
    %205 = vmatprep.mubr.f32.mxu0 0.0
    %206 = vmatmul.mubr.f32.gmra.mxu0 %v139
    %v207 = vpop.f32.mrf.mxu0
    %v208 = vadd.f32 %v135, %v207
    %v209 = vpop.f32.mrf.mxu0
    %210 = vdwg.mxu0
    %v211 = vmax.f32 %v208, 0.0
    %v212 = vld [vmem:[%s5] sm:$0xff]
    %v213 = vld [vmem:[%s5 + $0x8] sm:$0xff]
    %v214 = vld [vmem:[%s5 + $0x10] sm:$0xf]
    %v215 = vld [vmem:[%s6] sm:$0x1]
    %v217 = vlaneseq
    %v218 = vshrl.u32 %v217, 7
    %v219 = vsub.s32 0, %v218
    %v220 = vrot.slane %v215, %v219
    %vm222 = vcmask 162816
    %v224 = vsel %vm222, %v211, 0
    %vm226 = vcmask 1043456
    %v228 = vsel %vm226, %v214, 0
    %230 = vmatprep.subr.mxu0 0.0
    %231 = vmatpush1.msra.mxu0 0.0
    %232 = vmatprep.subr.mxu0 0.0
    %233 = vmatpush1.msra.mxu0 0.0
    %234 = vmatprep.subr.mxu0 0.0
    %235 = vmatpush1.msra.mxu0 0.0
    %236 = vmatprep.subr.mxu0 0.0
    %237 = vmatpush1.msra.mxu0 0.0
    %238 = vmatprep.subr.mxu0 0.0
    %239 = vmatpush1.msra.mxu0 0.0
    %240 = vmatprep.subr.mxu0 0.0
    %241 = vmatpush1.msra.mxu0 0.0
    %242 = vmatprep.subr.mxu0 0.0
    %243 = vmatpush1.msra.mxu0 0.0
    %244 = vmatprep.subr.mxu0 0.0
    %245 = vmatpush1.msra.mxu0 0.0
    %246 = vmatprep.subr.mxu0 0.0
    %247 = vmatpush1.msra.mxu0 0.0
    %248 = vmatprep.subr.mxu0 0.0
    %249 = vmatpush1.msra.mxu0 0.0
    %250 = vmatprep.subr.mxu0 0.0
    %251 = vmatpush1.msra.mxu0 0.0
    %252 = vmatprep.subr.mxu0 0.0
    %253 = vmatpush1.msra.mxu0 0.0
    %254 = vmatprep.subr.mxu0 0.0
    %255 = vmatpush1.msra.mxu0 0.0
    %256 = vmatprep.subr.mxu0 0.0
    %257 = vmatpush1.msra.mxu0 %v228
    %258 = vmatprep.subr.mxu0 0.0
    %259 = vmatpush1.msra.mxu0 %v213
    %260 = vmatprep.subr.mxu0 0.0
    %261 = vmatpush1.msra.mxu0 %v212
    %262 = vmatprep.subr.mxu0 0.0
    %263 = vmatpush2.msra.mxu0 0.0
    %264 = vmatprep.subr.mxu0 0.0
    %265 = vmatpush2.msra.mxu0 0.0
    %266 = vmatprep.subr.mxu0 0.0
    %267 = vmatpush2.msra.mxu0 0.0
    %268 = vmatprep.subr.mxu0 0.0
    %269 = vmatpush2.msra.mxu0 0.0
    %270 = vmatprep.subr.mxu0 0.0
    %271 = vmatpush2.msra.mxu0 0.0
    %272 = vmatprep.subr.mxu0 0.0
    %273 = vmatpush2.msra.mxu0 0.0
    %274 = vmatprep.subr.mxu0 0.0
    %275 = vmatpush2.msra.mxu0 0.0
    %276 = vmatprep.subr.mxu0 0.0
    %277 = vmatpush2.msra.mxu0 0.0
    %278 = vmatprep.subr.mxu0 0.0
    %279 = vmatpush2.msra.mxu0 0.0
    %280 = vmatprep.subr.mxu0 0.0
    %281 = vmatpush2.msra.mxu0 0.0
    %282 = vmatprep.subr.mxu0 0.0
    %283 = vmatpush2.msra.mxu0 0.0
    %284 = vmatprep.subr.mxu0 0.0
    %285 = vmatpush2.msra.mxu0 0.0
    %286 = vmatprep.subr.mxu0 0.0
    %287 = vmatpush2.msra.mxu0 0.0
    %288 = vmatprep.subr.mxu0 0.0
    %289 = vmatpush2.msra.mxu0 0.0
    %290 = vmatprep.subr.mxu0 0.0
    %291 = vmatpush2.msra.mxu0 0.0
    %292 = vmatprep.subr.mxu0 0.0
    %293 = vmatpush2.msra.mxu0 0.0
    %294 = vmatprep.mubr.f32.mxu0 0.0
    %295 = vmatmul.mubr.f32.gmra.mxu0 %v224
    %v296 = vpop.f32.mrf.mxu0
    %v297 = vadd.f32 %v220, %v296
    %v298 = vpop.f32.mrf.mxu0
    %299 = vdwg.mxu0
    %v300 = vmax.f32 %v297, 0.0
    %v301 = vld [vmem:[%s7] sm:$0xff]
    %v302 = vld [vmem:[%s7 + $0x8] sm:$0x3]
    %v303 = vld [vmem:[%s8] sm:$0x1]
    %v305 = vlaneseq
    %v306 = vshrl.u32 %v305, 7
    %v307 = vsub.s32 0, %v306
    %v308 = vrot.slane %v303, %v307
    %vm310 = vcmask 80896
    %v312 = vsel %vm310, %v300, 0
    %vm314 = vcmask 1041408
    %v316 = vsel %vm314, %v302, 0
    %318 = vmatprep.subr.mxu0 0.0
    %319 = vmatpush1.msra.mxu0 0.0
    %320 = vmatprep.subr.mxu0 0.0
    %321 = vmatpush1.msra.mxu0 0.0
    %322 = vmatprep.subr.mxu0 0.0
    %323 = vmatpush1.msra.mxu0 0.0
    %324 = vmatprep.subr.mxu0 0.0
    %325 = vmatpush1.msra.mxu0 0.0
    %326 = vmatprep.subr.mxu0 0.0
    %327 = vmatpush1.msra.mxu0 0.0
    %328 = vmatprep.subr.mxu0 0.0
    %329 = vmatpush1.msra.mxu0 0.0
    %330 = vmatprep.subr.mxu0 0.0
    %331 = vmatpush1.msra.mxu0 0.0
    %332 = vmatprep.subr.mxu0 0.0
    %333 = vmatpush1.msra.mxu0 0.0
    %334 = vmatprep.subr.mxu0 0.0
    %335 = vmatpush1.msra.mxu0 0.0
    %336 = vmatprep.subr.mxu0 0.0
    %337 = vmatpush1.msra.mxu0 0.0
    %338 = vmatprep.subr.mxu0 0.0
    %339 = vmatpush1.msra.mxu0 0.0
    %340 = vmatprep.subr.mxu0 0.0
    %341 = vmatpush1.msra.mxu0 0.0
    %342 = vmatprep.subr.mxu0 0.0
    %343 = vmatpush1.msra.mxu0 0.0
    %344 = vmatprep.subr.mxu0 0.0
    %345 = vmatpush1.msra.mxu0 0.0
    %346 = vmatprep.subr.mxu0 0.0
    %347 = vmatpush1.msra.mxu0 %v316
    %348 = vmatprep.subr.mxu0 0.0
    %349 = vmatpush1.msra.mxu0 %v301
    %350 = vmatprep.subr.mxu0 0.0
    %351 = vmatpush2.msra.mxu0 0.0
    %352 = vmatprep.subr.mxu0 0.0
    %353 = vmatpush2.msra.mxu0 0.0
    %354 = vmatprep.subr.mxu0 0.0
    %355 = vmatpush2.msra.mxu0 0.0
    %356 = vmatprep.subr.mxu0 0.0
    %357 = vmatpush2.msra.mxu0 0.0
    %358 = vmatprep.subr.mxu0 0.0
    %359 = vmatpush2.msra.mxu0 0.0
    %360 = vmatprep.subr.mxu0 0.0
    %361 = vmatpush2.msra.mxu0 0.0
    %362 = vmatprep.subr.mxu0 0.0
    %363 = vmatpush2.msra.mxu0 0.0
    %364 = vmatprep.subr.mxu0 0.0
    %365 = vmatpush2.msra.mxu0 0.0
    %366 = vmatprep.subr.mxu0 0.0
    %367 = vmatpush2.msra.mxu0 0.0
    %368 = vmatprep.subr.mxu0 0.0
    %369 = vmatpush2.msra.mxu0 0.0
    %370 = vmatprep.subr.mxu0 0.0
    %371 = vmatpush2.msra.mxu0 0.0
    %372 = vmatprep.subr.mxu0 0.0
    %373 = vmatpush2.msra.mxu0 0.0
    %374 = vmatprep.subr.mxu0 0.0
    %375 = vmatpush2.msra.mxu0 0.0
    %376 = vmatprep.subr.mxu0 0.0
    %377 = vmatpush2.msra.mxu0 0.0
    %378 = vmatprep.subr.mxu0 0.0
    %379 = vmatpush2.msra.mxu0 0.0
    %380 = vmatprep.subr.mxu0 0.0
    %381 = vmatpush2.msra.mxu0 0.0
    %382 = vmatprep.mubr.f32.mxu0 0.0
    %383 = vmatmul.mubr.f32.gmra.mxu0 %v312
    %v384 = vpop.f32.mrf.mxu0
    %v385 = vadd.f32 %v308, %v384
    %v386 = vpop.f32.mrf.mxu0
    %387 = vdwg.mxu0
    %vm388 = vcmask 39936
    %v389 = vsel %vm388, %v385, -inf
    %390 = vmax.xlane.f32.xlu0 %v389
    %v391 = vpop.xlane.xlu0 %390
    %v392 = vsub.f32 %v385, %v391
    %v393 = vmul.f32 %v392, 1.442695
    %v394 = vpow.pop %v393
    %v395 = vsel %vm388, %v394, 0.0
    %396 = vadd.xlane.f32.xlu0 %v395
    %v397 = vpop.xlane.xlu0 %396
    %v398 = vrcp.pop %v397
    %v399 = vmul.f32 %v394, %v398
    %400 = vst.msk [vmem:[#allocation2] sm:$0xff] %vm388, %v399
    // Predicated region
    $region38: #{tpu_custom_call.1} parent=1 // pred_check
      _
    $region39: #{tpu_custom_call.1} parent=1 // pred_check_branch
      %402 = sbr.rel (0) target = $region41
    $region40: #{tpu_custom_call.1} parent=1 // pred_region
      %s404 = ssub.s32 128, 128
      %405 = vsyncadd [#allocation3], %s404
      %s407 = sshll.u32 [#allocation2], 4
      %s408 = int_to_ptr.vmem [resolvable:$true] %s407
      %410 = dma.vmem_to_hbm [thread:$0]  %s408, 128, %s9, [#allocation3]
    $region41: #{tpu_custom_call.1} parent=1 // pred_fallthru
      _
    // Predicated region
    $region42: #{tpu_custom_call.1} parent=1 // pred_check
      _
    $region43: #{tpu_custom_call.1} parent=1 // pred_check_branch
      %412 = sbr.rel (0) target = $region45
    $region44: #{tpu_custom_call.1} parent=1 // pred_region
      %413 = dma.done [#allocation3], 128
    $region45: #{tpu_custom_call.1} parent=1 // pred_fallthru
      _
    %414 = vsyncpa [#allocation3], 1

</llo_original>
